<compile_context>
chip_gen: v5e
topology: v5e:2x2
jax: 0.10.0
libtpu: 0.0.40
codegen_flags: <defaults>
</compile_context>

<pallas_src>
import functools

import jax
import jax.numpy as jnp
from jax.experimental import pallas as pl
from jax.experimental.pallas import tpu as pltpu


# ----------------------------------------------------------------------------
# Kernel
# ----------------------------------------------------------------------------
def _pair_loss_kernel(score_ref, label_ref, mask_ref, refer_ref, out_ref, *,
                      batch, seq_len, block_rows, block_cols,
                      mask_rows, mask_cols):
    # Up-cast on the VMEM tile (free VPU work) -- inputs travel narrow over HBM.
    score = score_ref[...].astype(jnp.float32)      # [TB, TS]
    label = label_ref[...].astype(jnp.float32)      # [TB, TS]
    mask = mask_ref[...].astype(jnp.float32)        # [TB, TS]  (mask_cls.float())
    refer = refer_ref[...]                          # [TB, 1]   f32, broadcasts

    # loss = log1p(exp(-(refer - score))) = softplus(score - refer), stable form.
    x = score - refer
    softplus = jnp.maximum(x, 0.0) + jnp.log1p(jnp.exp(-jnp.abs(x)))
    loss = softplus * mask * (1.0 - label)

    # Ragged-edge masking (only emitted when the grid overhangs the array).
    if mask_rows or mask_cols:
        valid = None
        if mask_rows:
            r = jax.lax.broadcasted_iota(jnp.int32, loss.shape, 0)
            valid = (pl.program_id(0) * block_rows + r) < batch
        if mask_cols:
            c = jax.lax.broadcasted_iota(jnp.int32, loss.shape, 1)
            cvalid = (pl.program_id(1) * block_cols + c) < seq_len
            valid = cvalid if valid is None else (valid & cvalid)
        # where(), not multiply: overhang DMA bytes may decode to NaN/inf.
        loss = jnp.where(valid, loss, 0.0)

    # Fold TB rows down to 8 sublanes with tile-aligned halving slices and
    # pure VPU adds (block_rows is a power of two >= 32, so every slice stays
    # on an 8-row tile boundary). The outer jnp.sum does the final reduce.
    slab = loss
    while slab.shape[0] > 8:
        half = slab.shape[0] // 2
        slab = slab[:half, :] + slab[half:, :]
    out_ref[0, 0] = slab                            # lane-dense (8, TS) partial


# ----------------------------------------------------------------------------
# Tile selection (generation aware)
# ----------------------------------------------------------------------------
def _round_up(x, m):
    return ((x + m - 1) // m) * m


def _floor_pow2(x):
    return 1 << (max(1, int(x)).bit_length() - 1)


def _choose_tiles(B, S, in_bytes_per_elem, block_rows=None, block_cols=None):
    """Pick (batch_tile, col_tile, vmem_limit_bytes).

    Budget accounts for 2x double-buffered narrow inputs plus ~20 B/elem of
    live f32 temporaries, against the actual VMEM of the current generation
    (v5e/v6e: 128 MiB, v7x: 64 MiB per TensorCore)."""
    try:
        vmem_cap = int(pltpu.get_tpu_info().vmem_capacity_bytes)
    except Exception:
        vmem_cap = 64 << 20                      # conservative: v7x per-TC VMEM
    vmem_limit = int(min(vmem_cap * 3 // 4, 96 << 20))   # 48 MiB v7x, 96 MiB v5e/v6e

    # Column (lane) tile: full S unless S is huge, then 128-aligned chunks.
    if block_cols is not None:
        ts = S if int(block_cols) >= S else max(128, (int(block_cols) // 128) * 128)
    else:
        ts = S if S <= 8192 else 4096
    ts_lanes = _round_up(ts, 128)                # real per-row VMEM footprint

    # Row (batch) tile.
    if block_rows is not None:
        rows = max(32, _floor_pow2(block_rows))
    else:
        per_elem = 2 * in_bytes_per_elem + 20    # dbl-buffered inputs + f32 temps
        rows = int(vmem_limit * 0.6) // max(1, per_elem * ts_lanes)
        rows = max(32, min(rows, 2048))
        # Keep >= 2 (ideally 4) batch tiles so the "parallel" axis can be
        # sharded across TensorCores (v7x megacore).
        if B >= 128:
            rows = min(rows, _round_up(-(-B // 4), 32))
        elif B >= 64:
            rows = min(rows, _round_up(-(-B // 2), 32))
        rows = min(rows, _round_up(B, 32))       # don't blow tiny batches up
        rows = max(32, _floor_pow2(rows))        # power of two: clean VPU fold
    return rows, ts, vmem_limit


# ----------------------------------------------------------------------------
# pallas_call wrapper
# ----------------------------------------------------------------------------
def pair_loss_pallas(sent_score, label, mask_cls, max_index, *,
                     block_rows=None, block_cols=None):
    """sent_score/label: [B,S] (f32 or bf16 / f32 or int8); mask_cls: [B,S]
    (int8 preferred, bool accepted); max_index: [B,1] or [B] int."""
    B, S = sent_score.shape

    # Caller contract: ship narrow dtypes. bool is accepted for compatibility
    # only (the cast below is an HBM pre-pass producers should avoid).
    if mask_cls.dtype == jnp.bool_:
        mask_cls = mask_cls.astype(jnp.int8)
    if label.dtype == jnp.bool_:
        label = label.astype(jnp.int8)

    idx = max_index.astype(jnp.int32).reshape(B, 1)
    # Gather the per-row reference score once here (B*4 bytes) instead of a
    # per-tile one-hot gather + XLU reduce inside the kernel.
    refer = jnp.take_along_axis(sent_score, idx, axis=1).astype(jnp.float32)

    in_bytes = (jnp.dtype(sent_score.dtype).itemsize
                + jnp.dtype(label.dtype).itemsize
                + jnp.dtype(mask_cls.dtype).itemsize)
    tb, ts, vmem_limit = _choose_tiles(B, S, in_bytes, block_rows, block_cols)

    nb = pl.cdiv(B, tb)
    ns = pl.cdiv(S, ts)

    out_bytes = nb * ns * 8 * ts * 4
    cost = pl.CostEstimate(
        flops=10 * B * S,
        transcendentals=2 * B * S,
        bytes_accessed=(sent_score.nbytes + label.nbytes + mask_cls.nbytes
                        + refer.nbytes + out_bytes),
    )

    kernel = functools.partial(
        _pair_loss_kernel,
        batch=B, seq_len=S, block_rows=tb, block_cols=ts,
        mask_rows=(B % tb != 0), mask_cols=(S % ts != 0))

    partials = pl.pallas_call(
        kernel,
        out_shape=jax.ShapeDtypeStruct((nb, ns, 8, ts), jnp.float32),
        grid=(nb, ns),
        in_specs=[
            pl.BlockSpec((tb, ts), lambda i, j: (i, j)),   # sent_score
            pl.BlockSpec((tb, ts), lambda i, j: (i, j)),   # label
            pl.BlockSpec((tb, ts), lambda i, j: (i, j)),   # mask_cls
            pl.BlockSpec((tb, 1), lambda i, j: (i, 0)),    # refer (gathered max)
        ],
        out_specs=pl.BlockSpec((1, 1, 8, ts), lambda i, j: (i, j, 0, 0)),
        compiler_params=pltpu.CompilerParams(
            dimension_semantics=("parallel", "parallel"),
            vmem_limit_bytes=vmem_limit),
        cost_estimate=cost,
    )(sent_score, label, mask_cls, refer)

    return jnp.sum(partials)


def pair_loss(sent_score, label, mask_cls, max_index, *,
              block_rows=None, block_cols=None):
    """Public entry: tiny problems stay in fused XLA (launch overhead
    dominates); everything else dispatches the Pallas kernel."""
    if sent_score.size < 4096:
        return _pair_loss_ref(sent_score, label, mask_cls, max_index)
    return pair_loss_pallas(sent_score, label, mask_cls, max_index,
                            block_rows=block_rows, block_cols=block_cols)


# ----------------------------------------------------------------------------
# Pure-JAX reference (direct translation of the PyTorch module, math in f32)
# ----------------------------------------------------------------------------
def _pair_loss_ref(sent_score, label, mask_cls, max_index):
    score = sent_score.astype(jnp.float32)
    B = score.shape[0]
    idx = max_index.astype(jnp.int32).reshape(B, 1)
    max_num = jnp.take_along_axis(score, idx, axis=1)            # [B,1]
    refer = jnp.broadcast_to(max_num, score.shape)
    loss = jnp.log1p(jnp.exp(-(refer - score)))
    loss = loss * mask_cls.astype(jnp.float32) * (1.0 - label.astype(jnp.float32))
    return loss.sum()


# ----------------------------------------------------------------------------
# Demo / self-test
# ----------------------------------------------------------------------------
def _make_inputs(key, B, S, *, score_dtype=jnp.float32, label_dtype=jnp.float32):
    k1, k2, k3 = jax.random.split(key, 3)
    sent_score = jax.random.uniform(k1, (B, S), dtype=jnp.float32).astype(score_dtype)
    label = (jax.random.uniform(k2, (B, S)) > 0.7).astype(label_dtype)
    lens = jax.random.randint(k3, (B,), minval=1, maxval=S + 1)
    mask_bool = jnp.arange(S)[None, :] < lens[:, None]           # [B,S]
    mask_cls = mask_bool.astype(jnp.int8)                        # narrow caller contract
    masked = jnp.where(mask_bool, sent_score.astype(jnp.float32), -jnp.inf)
    max_index = jnp.argmax(masked, axis=1)[:, None].astype(jnp.int32)
    return sent_score, label, mask_cls, max_index


if __name__ == "__main__":
    key = jax.random.PRNGKey(0)
    k_small, k_med, k_nar = jax.random.split(key, 3)

    # 1) Tiny shape consistent with the module (batch=2, seq=8): exercises the
    #    single ragged batch tile (2 valid rows of a 32-row block).
    args_small = _make_inputs(k_small, B=2, S=8)
    out_small = jax.block_until_ready(pair_loss_pallas(*args_small))
    ref_small = _pair_loss_ref(*args_small)
    assert jnp.allclose(out_small, ref_small, rtol=1e-4, atol=1e-3), (out_small, ref_small)

    # 2) Non-multiple batch (B=70, tb=32): 3 parallel batch tiles, last one
    #    ragged and masked in-kernel (no wrapper padding copy).
    args_med = _make_inputs(k_med, B=70, S=136)
    out_med = jax.block_until_ready(pair_loss_pallas(*args_med, block_rows=32))
    ref_med = _pair_loss_ref(*args_med)
    assert jnp.allclose(out_med, ref_med, rtol=1e-4, atol=1e-3), (out_med, ref_med)

    # 3) Narrow-dtype caller contract (bf16 score, int8 label) + S tiling with
    #    a ragged column tile (S=136, ts=128 -> 2 column tiles).
    args_nar = _make_inputs(k_nar, B=70, S=136,
                            score_dtype=jnp.bfloat16, label_dtype=jnp.int8)
    out_nar = jax.block_until_ready(
        pair_loss_pallas(*args_nar, block_rows=32, block_cols=128))
    ref_nar = _pair_loss_ref(*args_nar)
    assert jnp.allclose(out_nar, ref_nar, rtol=1e-4, atol=1e-3), (out_nar, ref_nar)

    # 4) Public wrapper with automatic (generation-aware) tile selection.
    out_auto = jax.block_until_ready(pair_loss(*args_med))
    assert jnp.allclose(out_auto, ref_med, rtol=1e-4, atol=1e-3), (out_auto, ref_med)

    print("KERNEL_OK")
</pallas_src>

<mosaic_0001>
module attributes {stable_mosaic.version = 11 : i64} {
  func.func @_pair_loss_kernel(%arg0: i32, %arg1: i32, %arg2: memref<32x8xf32, #tpu.memory_space<vmem>>, %arg3: memref<32x8xf32, #tpu.memory_space<vmem>>, %arg4: memref<32x8xi8, #tpu.memory_space<vmem>>, %arg5: memref<32x1xf32, #tpu.memory_space<vmem>>, %arg6: memref<1x1x8x8xf32, #tpu.memory_space<vmem>>) attributes {dimension_semantics = [#tpu.dimension_semantics<parallel>, #tpu.dimension_semantics<parallel>], iteration_bounds = array<i64: 1, 1>, scalar_prefetch = 0 : i64, scratch_operands = 0 : i64, tpu.core_type = #tpu.core_type<tc>, window_params = [{transform_indices = @transform_0, window_bounds = array<i64: 32, 8>}, {transform_indices = @transform_1, window_bounds = array<i64: 32, 8>}, {transform_indices = @transform_2, window_bounds = array<i64: 32, 8>}, {transform_indices = @transform_3, window_bounds = array<i64: 32, 1>}, {transform_indices = @transform_4, window_bounds = array<i64: 1, 1, 8, 8>}]} {
    %c0 = arith.constant 0 : index
    %c0_0 = arith.constant 0 : index
    %0 = vector.load %arg2[%c0, %c0_0] : memref<32x8xf32, #tpu.memory_space<vmem>>, vector<32x8xf32>
    %c0_1 = arith.constant 0 : index
    %c0_2 = arith.constant 0 : index
    %1 = vector.load %arg3[%c0_1, %c0_2] : memref<32x8xf32, #tpu.memory_space<vmem>>, vector<32x8xf32>
    %c0_3 = arith.constant 0 : index
    %c0_4 = arith.constant 0 : index
    %2 = vector.load %arg4[%c0_3, %c0_4] : memref<32x8xi8, #tpu.memory_space<vmem>>, vector<32x8xi8>
    %3 = arith.sitofp %2 : vector<32x8xi8> to vector<32x8xf32>
    %c0_5 = arith.constant 0 : index
    %c0_6 = arith.constant 0 : index
    %4 = vector.load %arg5[%c0_5, %c0_6] : memref<32x1xf32, #tpu.memory_space<vmem>>, vector<32x1xf32>
    %5 = vector.broadcast %4 : vector<32x1xf32> to vector<32x8xf32>
    %6 = arith.subf %0, %5 : vector<32x8xf32>
    %cst = arith.constant 0.000000e+00 : f32
    %7 = vector.broadcast %cst : f32 to vector<32x8xf32>
    %8 = arith.maximumf %6, %7 : vector<32x8xf32>
    %9 = math.absf %6 : vector<32x8xf32>
    %cst_7 = arith.constant 0.000000e+00 : f32
    %10 = vector.broadcast %cst_7 : f32 to vector<32x8xf32>
    %11 = arith.subf %10, %9 : vector<32x8xf32>
    %12 = math.exp %11 : vector<32x8xf32>
    %13 = math.log1p %12 : vector<32x8xf32>
    %14 = arith.addf %8, %13 : vector<32x8xf32>
    %15 = arith.mulf %14, %3 : vector<32x8xf32>
    %cst_8 = arith.constant 1.000000e+00 : f32
    %16 = vector.broadcast %cst_8 : f32 to vector<32x8xf32>
    %17 = arith.subf %16, %1 : vector<32x8xf32>
    %18 = arith.mulf %15, %17 : vector<32x8xf32>
    %19 = tpu.iota {dimensions = array<i32: 0>} : vector<32x8xi32>
    %c32_i32 = arith.constant 32 : i32
    %20 = arith.muli %arg0, %c32_i32 : i32
    %21 = vector.broadcast %20 : i32 to vector<32x8xi32>
    %22 = arith.addi %21, %19 : vector<32x8xi32>
    %c2_i32 = arith.constant 2 : i32
    %23 = vector.broadcast %c2_i32 : i32 to vector<32x8xi32>
    %24 = arith.cmpi slt, %22, %23 : vector<32x8xi32>
    %cst_9 = arith.constant 0.000000e+00 : f32
    %25 = vector.broadcast %cst_9 : f32 to vector<32x8xf32>
    %26 = arith.select %24, %18, %25 : vector<32x8xi1>, vector<32x8xf32>
    %27 = vector.extract_strided_slice %26 {offsets = [0, 0], sizes = [16, 8], strides = [1, 1]} : vector<32x8xf32> to vector<16x8xf32>
    %28 = vector.extract_strided_slice %26 {offsets = [16, 0], sizes = [16, 8], strides = [1, 1]} : vector<32x8xf32> to vector<16x8xf32>
    %29 = arith.addf %27, %28 : vector<16x8xf32>
    %30 = vector.extract_strided_slice %29 {offsets = [0, 0], sizes = [8, 8], strides = [1, 1]} : vector<16x8xf32> to vector<8x8xf32>
    %31 = vector.extract_strided_slice %29 {offsets = [8, 0], sizes = [8, 8], strides = [1, 1]} : vector<16x8xf32> to vector<8x8xf32>
    %32 = arith.addf %30, %31 : vector<8x8xf32>
    %c0_10 = arith.constant 0 : index
    %c0_11 = arith.constant 0 : index
    %c0_12 = arith.constant 0 : index
    %c0_13 = arith.constant 0 : index
    %33 = vector.load %arg6[%c0_10, %c0_11, %c0_12, %c0_13] : memref<1x1x8x8xf32, #tpu.memory_space<vmem>>, vector<1x1x8x8xf32>
    %34 = vector.shape_cast %33 : vector<1x1x8x8xf32> to vector<8x8xf32>
    %35 = vector.shape_cast %32 : vector<8x8xf32> to vector<1x1x8x8xf32>
    tpu.vector_store %arg6[%c0_10, %c0_11, %c0_12, %c0_13], %35 {strides = array<i32>} : memref<1x1x8x8xf32, #tpu.memory_space<vmem>>, vector<1x1x8x8xf32>,
    return
  }
  func.func @transform_0(%arg0: i32, %arg1: i32) -> (i32, i32) {
    %c0_i32 = arith.constant 0 : i32
    return %arg0, %arg1 : i32, i32
  }
  func.func @transform_1(%arg0: i32, %arg1: i32) -> (i32, i32) {
    %c0_i32 = arith.constant 0 : i32
    return %arg0, %arg1 : i32, i32
  }
  func.func @transform_2(%arg0: i32, %arg1: i32) -> (i32, i32) {
    %c0_i32 = arith.constant 0 : i32
    return %arg0, %arg1 : i32, i32
  }
  func.func @transform_3(%arg0: i32, %arg1: i32) -> (i32, i32) {
    %c0_i32 = arith.constant 0 : i32
    %c0_i32_0 = arith.constant 0 : i32
    return %arg0, %c0_i32 : i32, i32
  }
  func.func @transform_4(%arg0: i32, %arg1: i32) -> (i32, i32, i32, i32) {
    %c0_i32 = arith.constant 0 : i32
    %c0_i32_0 = arith.constant 0 : i32
    %c0_i32_1 = arith.constant 0 : i32
    return %arg0, %arg1, %c0_i32, %c0_i32_0 : i32, i32, i32, i32
  }
}

</mosaic_0001>

<llo_original>
// kernel: tpu_custom_call.1
$region0: #{tpu_custom_call.1}
  #allocation0 [shape = 'u32[]', space=smem, size = 0x4, offset = 0x4, fixed_abs, tag = 'smem constant byte address 0x4 - core index']
  #allocation1 [shape = 'u32[72,128]{1,0:T(1,128)}', space=vmem, size = 0x9000, scoped, tag = 'internal scratch']
  %s0 = inlined_call_operand.vmem [shape: f32[2,8], index: 0, kind: input, shape index: {}]
  %s1 = inlined_call_operand.hbm [shape: f32[2,8], index: 1, kind: input, shape index: {}]
  %s2 = inlined_call_operand.vmem [shape: s8[2,8], index: 2, kind: input, shape index: {}]
  %s3 = inlined_call_operand.vmem [shape: f32[2,1], index: 3, kind: input, shape index: {}]
  %s4 = inlined_call_operand.hbm [shape: f32[1,1,8,8], index: 4, kind: output, shape index: {}]
  %s5 = sld [smem:[#allocation0]]
  $region30: #{tpu_custom_call.1} parent=0
    _
  %s7 = ssub.s32 1, %s5
  %s8 = scalar_select 0, %s7, %s5
  $region1: #{tpu_custom_call.1} parent=0
    #allocation2 [shape = 'u8[16384]{0}', space=vmem, size = 0x4000, scoped, tag = 'input window, operand 1, single buffered']
    #allocation3 [shape = 's32[1]{0}', space=sflag, size = 0x4, scoped, tag = 'scoped memory for tpu_custom_call.1']
    #allocation4 [shape = 's32[1]{0}', space=sflag, size = 0x4, scoped, tag = 'scoped memory for tpu_custom_call.1']
    #allocation5 [shape = 'u8[4096]{0}', space=vmem, size = 0x1000, scoped, tag = 'output window, operand 0, single buffered']
    %9 = vsyncpa [#allocation3], 0
    %10 = vsyncpa [#allocation4], 0
    // Predicated region
    $region2: #{tpu_custom_call.1} parent=1 // pred_check
      _
    $region3: #{tpu_custom_call.1} parent=1 // pred_check_branch
      %12 = sbr.rel (0) target = $region5
    $region4: #{tpu_custom_call.1} parent=1 // pred_region
      _
    $region5: #{tpu_custom_call.1} parent=1 // pred_fallthru
      _
    // Predicated region
    $region6: #{tpu_custom_call.1} parent=1 // pred_check
      _
    $region7: #{tpu_custom_call.1} parent=1 // pred_check_branch
      %14 = sbr.rel (0) target = $region9
    $region8: #{tpu_custom_call.1} parent=1 // pred_region
      %16 = vsyncadd [#allocation3], 480
      %s17 = sshll.u32 %s1, 4
      %s18 = int_to_ptr.hbm [resolvable:$true] %s17
      %s19 = sshll.u32 [#allocation2], 4
      %s20 = int_to_ptr.vmem [resolvable:$true] %s19
      %25 = dma.hbm_to_vmem [thread:$0]  %s18, 32, %s20, [#allocation3], 32, 32, 2
    $region9: #{tpu_custom_call.1} parent=1 // pred_fallthru
      _
    // Predicated region
    $region10: #{tpu_custom_call.1} parent=1 // pred_check
      _
    $region11: #{tpu_custom_call.1} parent=1 // pred_check_branch
      %27 = sbr.rel (0) target = $region13
    $region12: #{tpu_custom_call.1} parent=1 // pred_region
      _
    $region13: #{tpu_custom_call.1} parent=1 // pred_fallthru
      _
    // Predicated region
    $region14: #{tpu_custom_call.1} parent=1 // pred_check
      _
    $region15: #{tpu_custom_call.1} parent=1 // pred_check_branch
      %29 = sbr.rel (0) target = $region17
    $region16: #{tpu_custom_call.1} parent=1 // pred_region
      _
    $region17: #{tpu_custom_call.1} parent=1 // pred_fallthru
      _
    // Predicated region
    $region18: #{tpu_custom_call.1} parent=1 // pred_check
      _
    $region19: #{tpu_custom_call.1} parent=1 // pred_check_branch
      %31 = sbr.rel (0) target = $region21
    $region20: #{tpu_custom_call.1} parent=1 // pred_region
      %33 = dma.done [#allocation3], 512
    $region21: #{tpu_custom_call.1} parent=1 // pred_fallthru
      _
    %v34 = vld [vmem:[%s0] sm:$0xff]
    %v35 = vld [vmem:[%s0 + $0x8] sm:$0xff]
    %v36 = vld [vmem:[%s0 + $0x10] sm:$0xff]
    %v37 = vld [vmem:[%s0 + $0x18] sm:$0xff]
    %v38 = vld [vmem:[#allocation2] sm:$0xff]
    %v39 = vld [vmem:[#allocation2 + $0x8] sm:$0xff]
    %v40 = vld [vmem:[#allocation2 + $0x10] sm:$0xff]
    %v41 = vld [vmem:[#allocation2 + $0x18] sm:$0xff]
    %v42 = vld [vmem:[%s2] sm:$0x1]
    %v43 = vld [vmem:[%s2 + $0x1] sm:$0x1]
    %v44 = vld [vmem:[%s2 + $0x2] sm:$0x1]
    %v45 = vld [vmem:[%s2 + $0x3] sm:$0x1]
    %v46 = vld [vmem:[%s2 + $0x4] sm:$0x1]
    %v47 = vld [vmem:[%s2 + $0x5] sm:$0x1]
    %v48 = vld [vmem:[%s2 + $0x6] sm:$0x1]
    %v49 = vld [vmem:[%s2 + $0x7] sm:$0x1]
    %v50 = vunpack.c.0.s8 %v42
    %v51 = vunpack.c.0.s8 %v43
    %v52 = vunpack.c.0.s8 %v44
    %v53 = vunpack.c.0.s8 %v45
    %v54 = vunpack.c.0.s8 %v46
    %v55 = vunpack.c.0.s8 %v47
    %v56 = vunpack.c.0.s8 %v48
    %v57 = vunpack.c.0.s8 %v49
    %v58 = vcvt.s32.f32 %v50
    %v59 = vcvt.s32.f32 %v51
    %v60 = vcvt.s32.f32 %v52
    %v61 = vcvt.s32.f32 %v53
    %v62 = vcvt.s32.f32 %v54
    %v63 = vcvt.s32.f32 %v55
    %v64 = vcvt.s32.f32 %v56
    %v65 = vcvt.s32.f32 %v57
    %v66 = vld [vmem:[%s3] sm:$0xff]
    %v67 = vld [vmem:[%s3 + $0x8] sm:$0xff]
    %v68 = vld [vmem:[%s3 + $0x10] sm:$0xff]
    %v69 = vld [vmem:[%s3 + $0x18] sm:$0xff]
    %71 = vset.pattern.permute.xlu0 0
    %72 = vperm.xlu0 %71, %v66
    %v73 = vpop.permute.xlu0 %72
    %76 = vset.pattern.permute.xlu0 0
    %77 = vperm.xlu0 %76, %v67
    %v78 = vpop.permute.xlu0 %77
    %81 = vset.pattern.permute.xlu0 0
    %82 = vperm.xlu0 %81, %v68
    %v83 = vpop.permute.xlu0 %82
    %86 = vset.pattern.permute.xlu0 0
    %87 = vperm.xlu0 %86, %v69
    %v88 = vpop.permute.xlu0 %87
    %v90 = vsub.f32 %v34, %v73
    %v91 = vsub.f32 %v35, %v78
    %v92 = vsub.f32 %v36, %v83
    %v93 = vsub.f32 %v37, %v88
    %v94 = vmax.f32 %v90, 0.0
    %v95 = vmax.f32 %v91, 0.0
    %v96 = vmax.f32 %v92, 0.0
    %v97 = vmax.f32 %v93, 0.0
    %v98 = vand.u32 2147483647, %v90
    %v99 = vand.u32 2147483647, %v91
    %v100 = vand.u32 2147483647, %v92
    %v101 = vand.u32 2147483647, %v93
    %v102 = vsub.f32 0.0, %v98
    %v103 = vsub.f32 0.0, %v99
    %v104 = vsub.f32 0.0, %v100
    %v105 = vsub.f32 0.0, %v101
    %v106 = vmul.f32 %v102, 1.442695
    %v107 = vpow.pop %v106
    %v108 = vmul.f32 %v103, 1.442695
    %v109 = vpow.pop %v108
    %v110 = vmul.f32 %v104, 1.442695
    %v111 = vpow.pop %v110
    %v112 = vmul.f32 %v105, 1.442695
    %v113 = vpow.pop %v112
    %v114 = vadd.f32 %v107, 1.0
    %v115 = vlog2.pop %v114
    %v116 = vmul.f32 %v115, 0.6931472
    %v117 = vmul.f32 -0.5, %v107
    %v118 = vadd.f32 %v117, 1.0
    %v119 = vmul.f32 %v118, %v107
    %v120 = vand.u32 2147483647, %v107
    %vm121 = vcmp.lt.f32.partialorder %v120, 0.0004427343
    %v122 = vsel %vm121, %v119, %v116
    %v123 = vadd.f32 %v109, 1.0
    %v124 = vlog2.pop %v123
    %v125 = vmul.f32 %v124, 0.6931472
    %v126 = vmul.f32 -0.5, %v109
    %v127 = vadd.f32 %v126, 1.0
    %v128 = vmul.f32 %v127, %v109
    %v129 = vand.u32 2147483647, %v109
    %vm130 = vcmp.lt.f32.partialorder %v129, 0.0004427343
    %v131 = vsel %vm130, %v128, %v125
    %v132 = vadd.f32 %v111, 1.0
    %v133 = vlog2.pop %v132
    %v134 = vmul.f32 %v133, 0.6931472
    %v135 = vmul.f32 -0.5, %v111
    %v136 = vadd.f32 %v135, 1.0
    %v137 = vmul.f32 %v136, %v111
    %v138 = vand.u32 2147483647, %v111
    %vm139 = vcmp.lt.f32.partialorder %v138, 0.0004427343
    %v140 = vsel %vm139, %v137, %v134
    %v141 = vadd.f32 %v113, 1.0
    %v142 = vlog2.pop %v141
    %v143 = vmul.f32 %v142, 0.6931472
    %v144 = vmul.f32 -0.5, %v113
    %v145 = vadd.f32 %v144, 1.0
    %v146 = vmul.f32 %v145, %v113
    %v147 = vand.u32 2147483647, %v113
    %vm148 = vcmp.lt.f32.partialorder %v147, 0.0004427343
    %v149 = vsel %vm148, %v146, %v143
    %v150 = vadd.f32 %v94, %v122
    %v151 = vadd.f32 %v95, %v131
    %v152 = vadd.f32 %v96, %v140
    %v153 = vadd.f32 %v97, %v149
    %162 = vst [vmem:[#allocation1] ss:$2 sm:$0xff] %v58
    %s163 = scalar_lea.vmem [#allocation1], 1
    %164 = vst [vmem:[%s163] ss:$2 sm:$0xff] %v59
    %s165 = scalar_lea.vmem [#allocation1], 16
    %166 = vst [vmem:[%s165] ss:$2 sm:$0xff] %v60
    %s167 = scalar_lea.vmem [#allocation1], 17
    %168 = vst [vmem:[%s167] ss:$2 sm:$0xff] %v61
    %s169 = scalar_lea.vmem [#allocation1], 32
    %170 = vst [vmem:[%s169] ss:$2 sm:$0xff] %v62
    %s171 = scalar_lea.vmem [#allocation1], 33
    %172 = vst [vmem:[%s171] ss:$2 sm:$0xff] %v63
    %s173 = scalar_lea.vmem [#allocation1], 48
    %174 = vst [vmem:[%s173] ss:$2 sm:$0xff] %v64
    %s175 = scalar_lea.vmem [#allocation1], 49
    %176 = vst [vmem:[%s175] ss:$2 sm:$0xff] %v65
    %v177 = vld.sshfl [vmem:[#allocation1] sm:$0xff pattern:$0x75316420]
    %v178 = vld.sshfl [vmem:[#allocation1 + $0x10] sm:$0xff pattern:$0x75316420]
    %v179 = vld.sshfl [vmem:[#allocation1 + $0x20] sm:$0xff pattern:$0x75316420]
    %v180 = vld.sshfl [vmem:[#allocation1 + $0x30] sm:$0xff pattern:$0x75316420]
    %v185 = vmul.f32 %v150, %v177
    %v186 = vmul.f32 %v151, %v178
    %v187 = vmul.f32 %v152, %v179
    %v188 = vmul.f32 %v153, %v180
    %v189 = vsub.f32 1.0, %v38
    %v190 = vsub.f32 1.0, %v39
    %v191 = vsub.f32 1.0, %v40
    %v192 = vsub.f32 1.0, %v41
    %v193 = vmul.f32 %v185, %v189
    %v194 = vmul.f32 %v186, %v190
    %v195 = vmul.f32 %v187, %v191
    %v196 = vmul.f32 %v188, %v192
    %v197 = vlaneseq
    %v198 = vshrl.u32 %v197, 7
    %v199 = vadd.s32 %v198, 8
    %v200 = vadd.s32 %v198, 16
    %v201 = vadd.s32 %v198, 24
    %s202 = smul.u32 0, 32
    %v203 = vstv %s202
    %v204 = vadd.s32 %v203, %v198
    %v205 = vadd.s32 %v203, %v199
    %v206 = vadd.s32 %v203, %v200
    %v207 = vadd.s32 %v203, %v201
    %vm208 = vcmp.lt.s32.totalorder %v204, 2
    %vm209 = vcmp.lt.s32.totalorder %v205, 2
    %vm210 = vcmp.lt.s32.totalorder %v206, 2
    %vm211 = vcmp.lt.s32.totalorder %v207, 2
    %v212 = vsel %vm208, %v193, 0.0
    %v213 = vsel %vm209, %v194, 0.0
    %v214 = vsel %vm210, %v195, 0.0
    %v215 = vsel %vm211, %v196, 0.0
    %v216 = vadd.f32 %v212, %v214
    %v217 = vadd.f32 %v213, %v215
    %v218 = vadd.f32 %v216, %v217
    %vm219 = vcmask 64512
    %220 = vst.msk [vmem:[#allocation5] sm:$0xff] %vm219, %v218
    // Predicated region
    $region22: #{tpu_custom_call.1} parent=1 // pred_check
      _
    $region23: #{tpu_custom_call.1} parent=1 // pred_check_branch
      %222 = sbr.rel (0) target = $region25
    $region24: #{tpu_custom_call.1} parent=1 // pred_region
      %224 = vsyncadd [#allocation4], 0
      %s226 = sshll.u32 [#allocation5], 4
      %s227 = int_to_ptr.vmem [resolvable:$true] %s226
      %s228 = sshll.u32 %s4, 4
      %s229 = int_to_ptr.hbm [resolvable:$true] %s228
      %231 = dma.vmem_to_hbm [thread:$0]  %s227, 128, %s229, [#allocation4]
    $region25: #{tpu_custom_call.1} parent=1 // pred_fallthru
      _
    // Predicated region
    $region26: #{tpu_custom_call.1} parent=1 // pred_check
      _
    $region27: #{tpu_custom_call.1} parent=1 // pred_check_branch
      %233 = sbr.rel (0) target = $region29
    $region28: #{tpu_custom_call.1} parent=1 // pred_region
      %235 = dma.done [#allocation4], 128
    $region29: #{tpu_custom_call.1} parent=1 // pred_fallthru
      _
    %236 = vsyncpa [#allocation3], 1
    %237 = vsyncpa [#allocation4], 1

</llo_original>
